<compile_context>
chip_gen: v7x
topology: tpu7x:2x2x1
jax: 0.10.0
libtpu: 0.0.40
codegen_flags: <defaults>
</compile_context>

<pallas_src>
import jax
import jax.numpy as jnp
from jax.experimental import pallas as pl
from jax.experimental.pallas import tpu as pltpu

S_DIM = 8                      # state dimension (s_dim global in the PyTorch file)
A_DIM = 4                      # action dimension (a_dim global in the PyTorch file)
HIDDEN = 128                   # hidden width fixed by the module
K_FUSED = S_DIM + A_DIM + 1    # fused input width: [s | a | 1]
OUT_SUB = 8                    # head weight padded to one full sublane tile
LANE = 128                     # batch padding granularity (lane width)
DEFAULT_TILE_B = 1024          # batch columns per grid step (sweepable, multiple of 128)


def critic_kernel(xT_ref, w1T_ref, wo8_ref, bo_ref, qT_ref):
    # h^T = relu(W1^T @ [s; a; 1]^T)                      -> (HIDDEN, tile_b)
    hT = jnp.maximum(
        jnp.dot(w1T_ref[...], xT_ref[...], preferred_element_type=jnp.float32),
        0.0,
    )
    # Head matmul with 8-row padded wo (rows 1..7 are zero) -> (8, tile_b)
    q8 = jnp.dot(wo8_ref[...], hT, preferred_element_type=jnp.float32)
    # Keep only the real row, add the scalar output bias, lane-dense slim store.
    qT_ref[...] = (q8[0:1, :] + bo_ref[0]).astype(qT_ref.dtype)


def prepare_params(w1_s, b1_s, w1_a, b1_a, w_out, b_out):
    """Build kernel-side fused tensors ONCE (hoisted out of the forward call).

    Inputs use PyTorch nn.Linear layout: w1_s [128, s_dim], w1_a [128, a_dim],
    w_out [1, 128], biases 1-D.
    """
    assert w1_s.shape == (HIDDEN, S_DIM), w1_s.shape
    assert w1_a.shape == (HIDDEN, A_DIM), w1_a.shape
    assert w_out.shape == (1, HIDDEN), w_out.shape
    assert b1_s.shape == (HIDDEN,) and b1_a.shape == (HIDDEN,) and b_out.shape == (1,)

    b1 = (b1_s + b1_a).astype(jnp.float32)
    # Fused transposed first layer: h^T = relu(W1T @ [s; a; 1]^T), W1T: [128, 13]
    w1T = jnp.concatenate(
        [w1_s.astype(jnp.float32), w1_a.astype(jnp.float32), b1[:, None]], axis=1
    )
    # Head weight padded to 8 sublane rows (row 0 real) for clean MXU tiling.
    wo8 = jnp.zeros((OUT_SUB, HIDDEN), jnp.float32).at[0, :].set(
        w_out.astype(jnp.float32)[0]
    )
    bo = b_out.astype(jnp.float32).reshape(1)
    return w1T, wo8, bo


def critic_forward(s, a, w1T, wo8, bo, *, tile_b=DEFAULT_TILE_B):
    """s: [B, S_DIM], a: [B, A_DIM]. Returns q: [B, 1] (float32)."""
    assert tile_b % LANE == 0, "tile_b must be a multiple of 128 lanes"
    B = s.shape[0]
    assert s.shape == (B, S_DIM) and a.shape == (B, A_DIM)

    # Grid sizing: one step for small batches; tile_b-column steps otherwise
    # (n_tiles >= 2 automatically whenever the batch exceeds one tile -> both v7x TCs busy).
    b_lane = ((B + LANE - 1) // LANE) * LANE
    if b_lane <= tile_b:
        tile = b_lane
        n_tiles = 1
    else:
        tile = tile_b
        n_tiles = pl.cdiv(B, tile)
    b_pad = n_tiles * tile

    # Fused, transposed input: x^T = [s | a | 1]^T  -> [13, b_pad]
    x = jnp.concatenate(
        [s.astype(jnp.float32), a.astype(jnp.float32), jnp.ones((B, 1), jnp.float32)],
        axis=1,
    )
    if b_pad != B:
        x = jnp.pad(x, ((0, b_pad - B), (0, 0)))  # zero rows -> q = bo there, sliced off
    xT = x.T

    qT = pl.pallas_call(
        critic_kernel,
        out_shape=jax.ShapeDtypeStruct((1, b_pad), jnp.float32),
        grid=(n_tiles,),
        in_specs=[
            pl.BlockSpec((K_FUSED, tile), lambda i: (0, i)),      # x^T tile (batch on lanes)
            pl.BlockSpec((HIDDEN, K_FUSED), lambda i: (0, 0)),    # fused W1^T (resident)
            pl.BlockSpec((OUT_SUB, HIDDEN), lambda i: (0, 0)),    # padded head weight (resident)
            pl.BlockSpec(memory_space=pltpu.MemorySpace.SMEM),    # output bias scalar
        ],
        out_specs=pl.BlockSpec((1, tile), lambda i: (0, i)),      # slim lane-dense q^T
        compiler_params=pltpu.CompilerParams(
            dimension_semantics=("parallel",),   # batch tiles shard across TCs on v7x
        ),
    )(xT, w1T, wo8, bo)

    return qT[0, :B].reshape(B, 1)


def init_params(key):
    # PyTorch nn.Linear layout (weight [out, in]); weights ~ N(0, 0.01) as in the module,
    # biases ~ default uniform(-1/sqrt(fan_in), 1/sqrt(fan_in)).
    k1, k2, k3, k4, k5, k6 = jax.random.split(key, 6)
    w1_s = 0.01 * jax.random.normal(k1, (HIDDEN, S_DIM), dtype=jnp.float32)
    w1_a = 0.01 * jax.random.normal(k2, (HIDDEN, A_DIM), dtype=jnp.float32)
    w_out = 0.01 * jax.random.normal(k3, (1, HIDDEN), dtype=jnp.float32)
    b1_s = jax.random.uniform(k4, (HIDDEN,), jnp.float32, -1.0, 1.0) / jnp.sqrt(float(S_DIM))
    b1_a = jax.random.uniform(k5, (HIDDEN,), jnp.float32, -1.0, 1.0) / jnp.sqrt(float(A_DIM))
    b_out = jax.random.uniform(k6, (1,), jnp.float32, -1.0, 1.0) / jnp.sqrt(float(HIDDEN))
    return w1_s, b1_s, w1_a, b1_a, w_out, b_out


def reference(s, a, w1_s, b1_s, w1_a, b1_a, w_out, b_out):
    h = jnp.maximum(s @ w1_s.T + b1_s + a @ w1_a.T + b1_a, 0.0)
    return h @ w_out.T + b_out


if __name__ == "__main__":
    key = jax.random.PRNGKey(0)
    kp, ks, ka, ks2, ka2 = jax.random.split(key, 5)
    raw = init_params(kp)
    params = prepare_params(*raw)

    # Small-shape check consistent with the module (batch=2) -> single grid step.
    s_small = jax.random.normal(ks, (2, S_DIM), dtype=jnp.float32)
    a_small = jax.random.normal(ka, (2, A_DIM), dtype=jnp.float32)
    q_small = jax.block_until_ready(critic_forward(s_small, a_small, *params))
    ref_small = reference(s_small, a_small, *raw)
    assert q_small.shape == (2, 1)
    assert jnp.allclose(q_small, ref_small, atol=1e-4, rtol=1e-4)

    # Multi-tile check (forces 3 grid steps with 128-column tiles + ragged padding).
    B_big = 300
    s_big = jax.random.normal(ks2, (B_big, S_DIM), dtype=jnp.float32)
    a_big = jax.random.normal(ka2, (B_big, A_DIM), dtype=jnp.float32)
    q_big = jax.block_until_ready(critic_forward(s_big, a_big, *params, tile_b=128))
    ref_big = reference(s_big, a_big, *raw)
    assert q_big.shape == (B_big, 1)
    assert jnp.allclose(q_big, ref_big, atol=1e-4, rtol=1e-4)

    print("KERNEL_OK")
</pallas_src>

<mosaic_0001>
module attributes {stable_mosaic.version = 11 : i64} {
  func.func @critic_kernel(%arg0: i32, %arg1: memref<13x128xf32, #tpu.memory_space<vmem>>, %arg2: memref<128x13xf32, #tpu.memory_space<vmem>>, %arg3: memref<8x128xf32, #tpu.memory_space<vmem>>, %arg4: memref<1xf32, #tpu.memory_space<smem>>, %arg5: memref<1x128xf32, #tpu.memory_space<vmem>>) attributes {dimension_semantics = [#tpu.dimension_semantics<parallel>], iteration_bounds = array<i64: 1>, scalar_prefetch = 0 : i64, scratch_operands = 0 : i64, tpu.core_type = #tpu.core_type<tc>, window_params = [{transform_indices = @transform_0, window_bounds = array<i64: 13, 128>}, {pipeline_mode = #tpu.pipeline_mode<synchronous>, transform_indices = @transform_1, window_bounds = array<i64: 128, 13>}, {pipeline_mode = #tpu.pipeline_mode<synchronous>, transform_indices = @transform_2, window_bounds = array<i64: 8, 128>}, {transform_indices = @transform_3, window_bounds = array<i64: 1>}, {transform_indices = @transform_4, window_bounds = array<i64: 1, 128>}]} {
    %c0 = arith.constant 0 : index
    %c0_0 = arith.constant 0 : index
    %0 = vector.load %arg2[%c0, %c0_0] : memref<128x13xf32, #tpu.memory_space<vmem>>, vector<128x13xf32>
    %c0_1 = arith.constant 0 : index
    %c0_2 = arith.constant 0 : index
    %1 = vector.load %arg1[%c0_1, %c0_2] : memref<13x128xf32, #tpu.memory_space<vmem>>, vector<13x128xf32>
    %cst = arith.constant dense<0.000000e+00> : vector<128x128xf32>
    %2 = tpu.matmul %0, %1, %cst {dimension_numbers = #tpu.dot_dimension_numbers<[1], [0], [0], [1], [0, 0, 1, 1], [], []>} : vector<128x13xf32>, vector<13x128xf32>, vector<128x128xf32> -> vector<128x128xf32>
    %cst_3 = arith.constant 0.000000e+00 : f32
    %3 = vector.broadcast %cst_3 : f32 to vector<128x128xf32>
    %4 = arith.maximumf %2, %3 : vector<128x128xf32>
    %c0_4 = arith.constant 0 : index
    %c0_5 = arith.constant 0 : index
    %5 = vector.load %arg3[%c0_4, %c0_5] : memref<8x128xf32, #tpu.memory_space<vmem>>, vector<8x128xf32>
    %cst_6 = arith.constant dense<0.000000e+00> : vector<8x128xf32>
    %6 = tpu.matmul %5, %4, %cst_6 {dimension_numbers = #tpu.dot_dimension_numbers<[1], [0], [0], [1], [0, 0, 1, 1], [], []>} : vector<8x128xf32>, vector<128x128xf32>, vector<8x128xf32> -> vector<8x128xf32>
    %7 = vector.extract_strided_slice %6 {offsets = [0, 0], sizes = [1, 128], strides = [1, 1]} : vector<8x128xf32> to vector<1x128xf32>
    %c0_7 = arith.constant 0 : index
    %8 = memref.load %arg4[%c0_7] : memref<1xf32, #tpu.memory_space<smem>>
    %9 = vector.broadcast %8 : f32 to vector<1x128xf32>
    %10 = arith.addf %7, %9 : vector<1x128xf32>
    %c0_8 = arith.constant 0 : index
    %c0_9 = arith.constant 0 : index
    %11 = vector.load %arg5[%c0_8, %c0_9] : memref<1x128xf32, #tpu.memory_space<vmem>>, vector<1x128xf32>
    tpu.vector_store %arg5[%c0_8, %c0_9], %10 {strides = array<i32>} : memref<1x128xf32, #tpu.memory_space<vmem>>, vector<1x128xf32>,
    return
  }
  func.func @transform_0(%arg0: i32) -> (i32, i32) {
    %c0_i32 = arith.constant 0 : i32
    %c0_i32_0 = arith.constant 0 : i32
    return %c0_i32, %arg0 : i32, i32
  }
  func.func @transform_1(%arg0: i32) -> (i32, i32) {
    %c0_i32 = arith.constant 0 : i32
    %c0_i32_0 = arith.constant 0 : i32
    %c0_i32_1 = arith.constant 0 : i32
    return %c0_i32, %c0_i32_0 : i32, i32
  }
  func.func @transform_2(%arg0: i32) -> (i32, i32) {
    %c0_i32 = arith.constant 0 : i32
    %c0_i32_0 = arith.constant 0 : i32
    %c0_i32_1 = arith.constant 0 : i32
    return %c0_i32, %c0_i32_0 : i32, i32
  }
  func.func @transform_3(%arg0: i32) -> i32 {
    %c0_i32 = arith.constant 0 : i32
    %c0_i32_0 = arith.constant 0 : i32
    return %c0_i32 : i32
  }
  func.func @transform_4(%arg0: i32) -> (i32, i32) {
    %c0_i32 = arith.constant 0 : i32
    %c0_i32_0 = arith.constant 0 : i32
    return %c0_i32, %arg0 : i32, i32
  }
}

</mosaic_0001>

<llo_original>
// kernel: tpu_custom_call.1
$region0: #{tpu_custom_call.1}
  #allocation0 [shape = 'u32[]', space=smem, size = 0x4, offset = 0x4, fixed_abs, tag = 'smem constant byte address 0x4 - core index']
  #allocation1 [shape = 'u32[144,128]{1,0:T(1,128)}', space=vmem, size = 0x12000, scoped, tag = 'internal scratch']
  #allocation2 [shape = 'f32[1]{0:T(128)S(6)}', space=smem, size = 0x200, scoped, tag = 'scoped memory for tpu_custom_call.1']
  %s0 = inlined_call_operand.vmem [shape: f32[13,128], index: 0, kind: input, shape index: {}]
  %s1 = inlined_call_operand.vmem [shape: f32[128,13], index: 1, kind: input, shape index: {}]
  %s2 = inlined_call_operand.vmem [shape: f32[8,128], index: 2, kind: input, shape index: {}]
  %s3 = inlined_call_operand.<no memory space> [shape: f32[1], index: 3, kind: input, shape index: {}]
  %s4 = inlined_call_operand.hbm [shape: f32[1,128], index: 4, kind: output, shape index: {}]
  %s5 = sld [smem:[#allocation0]]
  $region26: #{tpu_custom_call.1} parent=0
    _
  %s7 = ssub.s32 1, %s5
  %s8 = scalar_select 0, %s7, %s5
  %9 = sst [smem:[#allocation2]] %s3
  $region1: #{tpu_custom_call.1} parent=0
    #allocation3 [shape = 'u8[512]{0}', space=vmem, size = 0x400, scoped, tag = 'output window, operand 0, single buffered']
    #allocation4 [shape = 's32[1]{0}', space=sflag, size = 0x4, scoped, tag = 'scoped memory for tpu_custom_call.1']
    %10 = vsyncpa [#allocation4], 0
    // Predicated region
    $region2: #{tpu_custom_call.1} parent=1 // pred_check
      _
    $region3: #{tpu_custom_call.1} parent=1 // pred_check_branch
      %12 = sbr.rel (0) target = $region5
    $region4: #{tpu_custom_call.1} parent=1 // pred_region
      _
    $region5: #{tpu_custom_call.1} parent=1 // pred_fallthru
      _
    // Predicated region
    $region6: #{tpu_custom_call.1} parent=1 // pred_check
      _
    $region7: #{tpu_custom_call.1} parent=1 // pred_check_branch
      %14 = sbr.rel (0) target = $region9
    $region8: #{tpu_custom_call.1} parent=1 // pred_region
      _
    $region9: #{tpu_custom_call.1} parent=1 // pred_fallthru
      _
    // Predicated region
    $region10: #{tpu_custom_call.1} parent=1 // pred_check
      _
    $region11: #{tpu_custom_call.1} parent=1 // pred_check_branch
      %16 = sbr.rel (0) target = $region13
    $region12: #{tpu_custom_call.1} parent=1 // pred_region
      _
    $region13: #{tpu_custom_call.1} parent=1 // pred_fallthru
      _
    // Predicated region
    $region14: #{tpu_custom_call.1} parent=1 // pred_check
      _
    $region15: #{tpu_custom_call.1} parent=1 // pred_check_branch
      %18 = sbr.rel (0) target = $region17
    $region16: #{tpu_custom_call.1} parent=1 // pred_region
      _
    $region17: #{tpu_custom_call.1} parent=1 // pred_fallthru
      _
    %v19 = vld [vmem:[%s1] sm:$0xff]
    %v20 = vld [vmem:[%s1 + $0x8] sm:$0xff]
    %v21 = vld [vmem:[%s1 + $0x10] sm:$0xff]
    %v22 = vld [vmem:[%s1 + $0x18] sm:$0xff]
    %v23 = vld [vmem:[%s1 + $0x20] sm:$0xff]
    %v24 = vld [vmem:[%s1 + $0x28] sm:$0xff]
    %v25 = vld [vmem:[%s1 + $0x30] sm:$0xff]
    %v26 = vld [vmem:[%s1 + $0x38] sm:$0xff]
    %v27 = vld [vmem:[%s1 + $0x40] sm:$0xff]
    %v28 = vld [vmem:[%s1 + $0x48] sm:$0xff]
    %v29 = vld [vmem:[%s1 + $0x50] sm:$0xff]
    %v30 = vld [vmem:[%s1 + $0x58] sm:$0xff]
    %v31 = vld [vmem:[%s1 + $0x60] sm:$0xff]
    %v32 = vld [vmem:[%s1 + $0x68] sm:$0xff]
    %v33 = vld [vmem:[%s1 + $0x70] sm:$0xff]
    %v34 = vld [vmem:[%s1 + $0x78] sm:$0xff]
    %v35 = vld [vmem:[%s0] sm:$0xff]
    %v36 = vld [vmem:[%s0 + $0x8] sm:$0x1f]
    %vm37 = vcmask 105472
    %v39 = vsel %vm37, %v19, 0
    %v42 = vsel %vm37, %v20, 0
    %v45 = vsel %vm37, %v21, 0
    %v48 = vsel %vm37, %v22, 0
    %v51 = vsel %vm37, %v23, 0
    %v54 = vsel %vm37, %v24, 0
    %v57 = vsel %vm37, %v25, 0
    %v60 = vsel %vm37, %v26, 0
    %v63 = vsel %vm37, %v27, 0
    %v66 = vsel %vm37, %v28, 0
    %v69 = vsel %vm37, %v29, 0
    %v72 = vsel %vm37, %v30, 0
    %v75 = vsel %vm37, %v31, 0
    %v78 = vsel %vm37, %v32, 0
    %v81 = vsel %vm37, %v33, 0
    %v84 = vsel %vm37, %v34, 0
    %vm86 = vcmask 1044480
    %v88 = vsel %vm86, %v36, 0
    %90 = vmatprep.subr.mxu0 0.0
    %91 = vmatpush1.msra.mxu0 %v35
    %92 = vmatprep.subr.mxu0 0.0
    %93 = vmatpush1.msra.mxu0 %v88
    %94 = vmatprep.subr.mxu0 0.0
    %95 = vmatpush1.msra.mxu0 0.0
    %96 = vmatprep.subr.mxu0 0.0
    %97 = vmatpush1.msra.mxu0 0.0
    %98 = vmatprep.subr.mxu0 0.0
    %99 = vmatpush1.msra.mxu0 0.0
    %100 = vmatprep.subr.mxu0 0.0
    %101 = vmatpush1.msra.mxu0 0.0
    %102 = vmatprep.subr.mxu0 0.0
    %103 = vmatpush1.msra.mxu0 0.0
    %104 = vmatprep.subr.mxu0 0.0
    %105 = vmatpush1.msra.mxu0 0.0
    %106 = vmatprep.subr.mxu0 0.0
    %107 = vmatpush1.msra.mxu0 0.0
    %108 = vmatprep.subr.mxu0 0.0
    %109 = vmatpush1.msra.mxu0 0.0
    %110 = vmatprep.subr.mxu0 0.0
    %111 = vmatpush1.msra.mxu0 0.0
    %112 = vmatprep.subr.mxu0 0.0
    %113 = vmatpush1.msra.mxu0 0.0
    %114 = vmatprep.subr.mxu0 0.0
    %115 = vmatpush1.msra.mxu0 0.0
    %116 = vmatprep.subr.mxu0 0.0
    %117 = vmatpush1.msra.mxu0 0.0
    %118 = vmatprep.subr.mxu0 0.0
    %119 = vmatpush1.msra.mxu0 0.0
    %120 = vmatprep.subr.mxu0 0.0
    %121 = vmatpush1.msra.mxu0 0.0
    %122 = vmatprep.subr.mxu0 0.0
    %123 = vmatpush1.msra.mxu0 0.0
    %124 = vmatprep.subr.mxu0 0.0
    %125 = vmatpush1.msra.mxu0 0.0
    %126 = vmatprep.subr.mxu0 0.0
    %127 = vmatpush1.msra.mxu0 0.0
    %128 = vmatprep.subr.mxu0 0.0
    %129 = vmatpush1.msra.mxu0 0.0
    %130 = vmatprep.subr.mxu0 0.0
    %131 = vmatpush1.msra.mxu0 0.0
    %132 = vmatprep.subr.mxu0 0.0
    %133 = vmatpush1.msra.mxu0 0.0
    %134 = vmatprep.subr.mxu0 0.0
    %135 = vmatpush1.msra.mxu0 0.0
    %136 = vmatprep.subr.mxu0 0.0
    %137 = vmatpush1.msra.mxu0 0.0
    %138 = vmatprep.subr.mxu0 0.0
    %139 = vmatpush1.msra.mxu0 0.0
    %140 = vmatprep.subr.mxu0 0.0
    %141 = vmatpush1.msra.mxu0 0.0
    %142 = vmatprep.subr.mxu0 0.0
    %143 = vmatpush1.msra.mxu0 0.0
    %144 = vmatprep.subr.mxu0 0.0
    %145 = vmatpush1.msra.mxu0 0.0
    %146 = vmatprep.subr.mxu0 0.0
    %147 = vmatpush1.msra.mxu0 0.0
    %148 = vmatprep.subr.mxu0 0.0
    %149 = vmatpush1.msra.mxu0 0.0
    %150 = vmatprep.subr.mxu0 0.0
    %151 = vmatpush1.msra.mxu0 0.0
    %152 = vmatprep.subr.mxu0 0.0
    %153 = vmatpush1.msra.mxu0 0.0
    %154 = vmatprep.mubr.f32.mxu0 0.0
    %155 = vmatmul.mubr.f32.gmra.mrb[0].mxu0 %v39
    %v156 = vpop.f32.mrb[0].mxu0
    %v157 = vadd.f32 0.0, %v156
    %v158 = vpop.f32.mrb[0].mxu0
    %159 = vmatprep.mubr.f32.mxu0 0.0
    %160 = vmatmul.mubr.f32.gmra.mrb[0].mxu0 %v42
    %v161 = vpop.f32.mrb[0].mxu0
    %v162 = vadd.f32 0.0, %v161
    %v163 = vpop.f32.mrb[0].mxu0
    %164 = vmatprep.mubr.f32.mxu0 0.0
    %165 = vmatmul.mubr.f32.gmra.mrb[0].mxu0 %v45
    %v166 = vpop.f32.mrb[0].mxu0
    %v167 = vadd.f32 0.0, %v166
    %v168 = vpop.f32.mrb[0].mxu0
    %169 = vmatprep.mubr.f32.mxu0 0.0
    %170 = vmatmul.mubr.f32.gmra.mrb[0].mxu0 %v48
    %v171 = vpop.f32.mrb[0].mxu0
    %v172 = vadd.f32 0.0, %v171
    %v173 = vpop.f32.mrb[0].mxu0
    %174 = vmatprep.mubr.f32.mxu0 0.0
    %175 = vmatmul.mubr.f32.gmra.mrb[0].mxu0 %v51
    %v176 = vpop.f32.mrb[0].mxu0
    %v177 = vadd.f32 0.0, %v176
    %v178 = vpop.f32.mrb[0].mxu0
    %179 = vmatprep.mubr.f32.mxu0 0.0
    %180 = vmatmul.mubr.f32.gmra.mrb[0].mxu0 %v54
    %v181 = vpop.f32.mrb[0].mxu0
    %v182 = vadd.f32 0.0, %v181
    %v183 = vpop.f32.mrb[0].mxu0
    %184 = vmatprep.mubr.f32.mxu0 0.0
    %185 = vmatmul.mubr.f32.gmra.mrb[0].mxu0 %v57
    %v186 = vpop.f32.mrb[0].mxu0
    %v187 = vadd.f32 0.0, %v186
    %v188 = vpop.f32.mrb[0].mxu0
    %189 = vmatprep.mubr.f32.mxu0 0.0
    %190 = vmatmul.mubr.f32.gmra.mrb[0].mxu0 %v60
    %v191 = vpop.f32.mrb[0].mxu0
    %v192 = vadd.f32 0.0, %v191
    %v193 = vpop.f32.mrb[0].mxu0
    %194 = vmatprep.mubr.f32.mxu0 0.0
    %195 = vmatmul.mubr.f32.gmra.mrb[0].mxu0 %v63
    %v196 = vpop.f32.mrb[0].mxu0
    %v197 = vadd.f32 0.0, %v196
    %v198 = vpop.f32.mrb[0].mxu0
    %199 = vmatprep.mubr.f32.mxu0 0.0
    %200 = vmatmul.mubr.f32.gmra.mrb[0].mxu0 %v66
    %v201 = vpop.f32.mrb[0].mxu0
    %v202 = vadd.f32 0.0, %v201
    %v203 = vpop.f32.mrb[0].mxu0
    %204 = vmatprep.mubr.f32.mxu0 0.0
    %205 = vmatmul.mubr.f32.gmra.mrb[0].mxu0 %v69
    %v206 = vpop.f32.mrb[0].mxu0
    %v207 = vadd.f32 0.0, %v206
    %v208 = vpop.f32.mrb[0].mxu0
    %209 = vmatprep.mubr.f32.mxu0 0.0
    %210 = vmatmul.mubr.f32.gmra.mrb[0].mxu0 %v72
    %v211 = vpop.f32.mrb[0].mxu0
    %v212 = vadd.f32 0.0, %v211
    %v213 = vpop.f32.mrb[0].mxu0
    %214 = vmatprep.mubr.f32.mxu0 0.0
    %215 = vmatmul.mubr.f32.gmra.mrb[0].mxu0 %v75
    %v216 = vpop.f32.mrb[0].mxu0
    %v217 = vadd.f32 0.0, %v216
    %v218 = vpop.f32.mrb[0].mxu0
    %219 = vmatprep.mubr.f32.mxu0 0.0
    %220 = vmatmul.mubr.f32.gmra.mrb[0].mxu0 %v78
    %v221 = vpop.f32.mrb[0].mxu0
    %v222 = vadd.f32 0.0, %v221
    %v223 = vpop.f32.mrb[0].mxu0
    %224 = vmatprep.mubr.f32.mxu0 0.0
    %225 = vmatmul.mubr.f32.gmra.mrb[0].mxu0 %v81
    %v226 = vpop.f32.mrb[0].mxu0
    %v227 = vadd.f32 0.0, %v226
    %v228 = vpop.f32.mrb[0].mxu0
    %229 = vmatprep.mubr.f32.mxu0 0.0
    %230 = vmatmul.mubr.f32.gmra.mrb[0].mxu0 %v84
    %v231 = vpop.f32.mrb[0].mxu0
    %v232 = vadd.f32 0.0, %v231
    %v233 = vpop.f32.mrb[0].mxu0
    %234 = vdwg.mxu0
    %v235 = vmax.f32 %v157, 0.0
    %v236 = vmax.f32 %v162, 0.0
    %v237 = vmax.f32 %v167, 0.0
    %v238 = vmax.f32 %v172, 0.0
    %v239 = vmax.f32 %v177, 0.0
    %v240 = vmax.f32 %v182, 0.0
    %v241 = vmax.f32 %v187, 0.0
    %v242 = vmax.f32 %v192, 0.0
    %v243 = vmax.f32 %v197, 0.0
    %v244 = vmax.f32 %v202, 0.0
    %v245 = vmax.f32 %v207, 0.0
    %v246 = vmax.f32 %v212, 0.0
    %v247 = vmax.f32 %v217, 0.0
    %v248 = vmax.f32 %v222, 0.0
    %v249 = vmax.f32 %v227, 0.0
    %v250 = vmax.f32 %v232, 0.0
    %v251 = vld [vmem:[%s2] sm:$0xff]
    %252 = vmatprep.subr.mxu0 0.0
    %253 = vmatpush1.msra.mxu0 %v235
    %254 = vmatprep.subr.mxu0 0.0
    %255 = vmatpush1.msra.mxu0 %v236
    %256 = vmatprep.subr.mxu0 0.0
    %257 = vmatpush1.msra.mxu0 %v237
    %258 = vmatprep.subr.mxu0 0.0
    %259 = vmatpush1.msra.mxu0 %v238
    %260 = vmatprep.subr.mxu0 0.0
    %261 = vmatpush1.msra.mxu0 %v239
    %262 = vmatprep.subr.mxu0 0.0
    %263 = vmatpush1.msra.mxu0 %v240
    %264 = vmatprep.subr.mxu0 0.0
    %265 = vmatpush1.msra.mxu0 %v241
    %266 = vmatprep.subr.mxu0 0.0
    %267 = vmatpush1.msra.mxu0 %v242
    %268 = vmatprep.subr.mxu0 0.0
    %269 = vmatpush1.msra.mxu0 %v243
    %270 = vmatprep.subr.mxu0 0.0
    %271 = vmatpush1.msra.mxu0 %v244
    %272 = vmatprep.subr.mxu0 0.0
    %273 = vmatpush1.msra.mxu0 %v245
    %274 = vmatprep.subr.mxu0 0.0
    %275 = vmatpush1.msra.mxu0 %v246
    %276 = vmatprep.subr.mxu0 0.0
    %277 = vmatpush1.msra.mxu0 %v247
    %278 = vmatprep.subr.mxu0 0.0
    %279 = vmatpush1.msra.mxu0 %v248
    %280 = vmatprep.subr.mxu0 0.0
    %281 = vmatpush1.msra.mxu0 %v249
    %282 = vmatprep.subr.mxu0 0.0
    %283 = vmatpush1.msra.mxu0 %v250
    %284 = vmatprep.subr.mxu0 0.0
    %285 = vmatpush1.msra.mxu0 0.0
    %286 = vmatprep.subr.mxu0 0.0
    %287 = vmatpush1.msra.mxu0 0.0
    %288 = vmatprep.subr.mxu0 0.0
    %289 = vmatpush1.msra.mxu0 0.0
    %290 = vmatprep.subr.mxu0 0.0
    %291 = vmatpush1.msra.mxu0 0.0
    %292 = vmatprep.subr.mxu0 0.0
    %293 = vmatpush1.msra.mxu0 0.0
    %294 = vmatprep.subr.mxu0 0.0
    %295 = vmatpush1.msra.mxu0 0.0
    %296 = vmatprep.subr.mxu0 0.0
    %297 = vmatpush1.msra.mxu0 0.0
    %298 = vmatprep.subr.mxu0 0.0
    %299 = vmatpush1.msra.mxu0 0.0
    %300 = vmatprep.subr.mxu0 0.0
    %301 = vmatpush1.msra.mxu0 0.0
    %302 = vmatprep.subr.mxu0 0.0
    %303 = vmatpush1.msra.mxu0 0.0
    %304 = vmatprep.subr.mxu0 0.0
    %305 = vmatpush1.msra.mxu0 0.0
    %306 = vmatprep.subr.mxu0 0.0
    %307 = vmatpush1.msra.mxu0 0.0
    %308 = vmatprep.subr.mxu0 0.0
    %309 = vmatpush1.msra.mxu0 0.0
    %310 = vmatprep.subr.mxu0 0.0
    %311 = vmatpush1.msra.mxu0 0.0
    %312 = vmatprep.subr.mxu0 0.0
    %313 = vmatpush1.msra.mxu0 0.0
    %314 = vmatprep.subr.mxu0 0.0
    %315 = vmatpush1.msra.mxu0 0.0
    %316 = vmatprep.mubr.f32.mxu0 0.0
    %317 = vmatmul.mubr.f32.gmra.mrb[0].mxu0 %v251
    %v318 = vpop.f32.mrb[0].mxu0
    %v319 = vadd.f32 0.0, %v318
    %v320 = vpop.f32.mrb[0].mxu0
    %321 = vdwg.mxu0
    %s322 = sld [smem:[#allocation2]]
    %v323 = vstv %s322
    %v324 = vadd.f32 %v319, %v323
    %325 = vst [vmem:[#allocation3] sm:$0x1] %v324
    // Predicated region
    $region18: #{tpu_custom_call.1} parent=1 // pred_check
      _
    $region19: #{tpu_custom_call.1} parent=1 // pred_check_branch
      %327 = sbr.rel (0) target = $region21
    $region20: #{tpu_custom_call.1} parent=1 // pred_region
      %s329 = ssub.s32 16, 16
      %330 = vsyncadd [#allocation4], %s329
      %s332 = sshll.u32 [#allocation3], 4
      %s333 = int_to_ptr.vmem [resolvable:$true] %s332
      %335 = dma.vmem_to_hbm [thread:$0]  %s333, 16, %s4, [#allocation4]
    $region21: #{tpu_custom_call.1} parent=1 // pred_fallthru
      _
    // Predicated region
    $region22: #{tpu_custom_call.1} parent=1 // pred_check
      _
    $region23: #{tpu_custom_call.1} parent=1 // pred_check_branch
      %337 = sbr.rel (0) target = $region25
    $region24: #{tpu_custom_call.1} parent=1 // pred_region
      %338 = dma.done [#allocation4], 16
    $region25: #{tpu_custom_call.1} parent=1 // pred_fallthru
      _
    %339 = vsyncpa [#allocation4], 1

</llo_original>
